<compile_context>
chip_gen: v7x
topology: tpu7x:2x2x1
jax: 0.10.0
libtpu: 0.0.40
codegen_flags: <defaults>
</compile_context>

<pallas_src>
import functools

import jax
import jax.numpy as jnp
from jax.experimental import pallas as pl
from jax.experimental.pallas import tpu as pltpu

LANE = 128      # vreg lane width (last dim)
SUBLANE = 16    # bf16 sublane packing (also valid for f32, which needs 8)


def _round_up(x, m):
    return ((x + m - 1) // m) * m


def qnet_kernel(x_ref, w1_ref, b1_ref, w2_ref, b2_ref, w3_ref, b3_ref, o_ref):
    # Three MXU matmuls with f32 accumulation; bias add + ReLU on the VPU.
    # Activations are cast back to the weight dtype (bf16 on the fast path)
    # before feeding the next matmul.
    x = x_ref[...]
    h1 = jnp.dot(x, w1_ref[...], preferred_element_type=jnp.float32) + b1_ref[...]
    h1 = jnp.maximum(h1, 0.0).astype(w2_ref.dtype)
    h2 = jnp.dot(h1, w2_ref[...], preferred_element_type=jnp.float32) + b2_ref[...]
    h2 = jnp.maximum(h2, 0.0).astype(w3_ref.dtype)
    out = jnp.dot(h2, w3_ref[...], preferred_element_type=jnp.float32) + b3_ref[...]
    o_ref[...] = out.astype(o_ref.dtype)


@functools.partial(jax.jit, static_argnames=("batch_tile", "compute_dtype"))
def qnetwork_forward(x, params, *, batch_tile=256, compute_dtype=jnp.bfloat16):
    """x: (B, n_states) f32; params: [(W, b)] with W:(in,out), b:(1,out).

    Returns (B, n_actions) f32, matching the PyTorch QNetwork forward
    (Linear -> ReLU -> Linear -> ReLU -> Linear).
    """
    (w1, b1), (w2, b2), (w3, b3) = params
    B, n_states = x.shape
    d1 = w1.shape[1]
    d2 = w2.shape[1]
    n_actions = w3.shape[1]

    # Lane-dense (multiple-of-128) feature dims.
    f_in = _round_up(n_states, LANE)
    f_h1 = _round_up(d1, LANE)
    f_h2 = _round_up(d2, LANE)
    f_out = _round_up(n_actions, LANE)

    # Batch tiling: one grid step for small batches; otherwise fixed tiles with
    # zero-padded batch rows so any B works.
    batch_tile = _round_up(batch_tile, SUBLANE)
    tile = _round_up(B, SUBLANE) if B <= batch_tile else batch_tile
    b_pad = _round_up(B, tile)
    grid = (b_pad // tile,)

    cd = jnp.dtype(compute_dtype)

    # Zero-padded, (possibly) down-cast operands.  Padded x columns are 0,
    # padded hidden columns stay 0 through bias-free pad + ReLU, padded output
    # columns are sliced off below, so results are bit-identical to unpadded.
    xp = jnp.zeros((b_pad, f_in), cd).at[:B, :n_states].set(x.astype(cd))
    w1p = jnp.zeros((f_in, f_h1), cd).at[:n_states, :d1].set(w1.astype(cd))
    w2p = jnp.zeros((f_h1, f_h2), cd).at[:d1, :d2].set(w2.astype(cd))
    w3p = jnp.zeros((f_h2, f_out), cd).at[:d2, :n_actions].set(w3.astype(cd))
    b1p = jnp.zeros((1, f_h1), jnp.float32).at[:, :d1].set(b1.astype(jnp.float32))
    b2p = jnp.zeros((1, f_h2), jnp.float32).at[:, :d2].set(b2.astype(jnp.float32))
    b3p = jnp.zeros((1, f_out), jnp.float32).at[:, :n_actions].set(b3.astype(jnp.float32))

    def whole(shape):
        # Full (small) parameter array with a constant index_map: DMA'd to VMEM
        # once and kept resident for every grid step.
        return pl.BlockSpec(shape, lambda i: (0, 0))

    param_bytes = sum(a.size * a.dtype.itemsize
                      for a in (w1p, b1p, w2p, b2p, w3p, b3p))
    cost = pl.CostEstimate(
        flops=2 * b_pad * (f_in * f_h1 + f_h1 * f_h2 + f_h2 * f_out),
        transcendentals=0,
        bytes_accessed=xp.size * xp.dtype.itemsize + param_bytes + b_pad * f_out * 4,
    )

    out_padded = pl.pallas_call(
        qnet_kernel,
        out_shape=jax.ShapeDtypeStruct((b_pad, f_out), jnp.float32),
        grid_spec=pl.GridSpec(
            grid=grid,
            in_specs=[
                pl.BlockSpec((tile, f_in), lambda i: (i, 0)),   # x batch tile
                whole(w1p.shape), whole(b1p.shape),
                whole(w2p.shape), whole(b2p.shape),
                whole(w3p.shape), whole(b3p.shape),
            ],
            out_specs=pl.BlockSpec((tile, f_out), lambda i: (i, 0)),
        ),
        compiler_params=pltpu.CompilerParams(
            dimension_semantics=("parallel",)),
        cost_estimate=cost,
    )(xp, w1p, b1p, w2p, b2p, w3p, b3p)

    return out_padded[:B, :n_actions]


def init_qnetwork_params(key, n_states, n_actions, network_sizes=(128, 128)):
    """Deterministic init matching PyTorch Linear's U(-1/sqrt(fan_in), 1/sqrt(fan_in)).

    Weights stored as (in_features, out_features) so the kernel computes
    x @ W + b, semantically identical to torch's x @ W_t.T + b.  Biases are
    (1, out) 2-D for clean VMEM layout.
    """
    sizes = [n_states, *network_sizes, n_actions]
    params = []
    for i in range(len(sizes) - 1):
        fan_in, fan_out = sizes[i], sizes[i + 1]
        key, kw, kb = jax.random.split(key, 3)
        bound = 1.0 / jnp.sqrt(jnp.float32(fan_in))
        w = jax.random.uniform(kw, (fan_in, fan_out), jnp.float32, -bound, bound)
        b = jax.random.uniform(kb, (1, fan_out), jnp.float32, -bound, bound)
        params.append((w, b))
    return params


def qnetwork_reference(x, params):
    (w1, b1), (w2, b2), (w3, b3) = params
    h = jnp.maximum(x @ w1 + b1, 0.0)
    h = jnp.maximum(h @ w2 + b2, 0.0)
    return h @ w3 + b3


if __name__ == "__main__":
    key = jax.random.PRNGKey(0)
    n_states, n_actions = 4, 2          # CartPole-like dims
    batch = 8

    kx, kp, kx2 = jax.random.split(key, 3)
    x = jax.random.normal(kx, (batch, n_states), jnp.float32)
    params = init_qnetwork_params(kp, n_states, n_actions, network_sizes=(128, 128))
    ref = qnetwork_reference(x, params)

    # 1) f32 compute path: tight check of padding / tiling logic
    #    (small batch -> single grid step, lane-dense padded output).
    out_f32 = jax.block_until_ready(
        qnetwork_forward(x, params, compute_dtype=jnp.float32))
    assert out_f32.shape == (batch, n_actions)
    assert jnp.allclose(out_f32, ref, atol=1e-5, rtol=1e-5), "f32 mismatch vs reference"

    # 2) bf16 fast path on a larger, non-tile-multiple batch: exercises batch
    #    zero-padding and a multi-step "parallel" grid; looser tolerance for
    #    bf16 operands with f32 accumulation.
    batch2 = 300
    x2 = jax.random.normal(kx2, (batch2, n_states), jnp.float32)
    ref2 = qnetwork_reference(x2, params)
    out_bf16 = jax.block_until_ready(
        qnetwork_forward(x2, params, batch_tile=128, compute_dtype=jnp.bfloat16))
    assert out_bf16.shape == (batch2, n_actions)
    assert jnp.allclose(out_bf16, ref2, atol=5e-2, rtol=5e-2), "bf16 mismatch vs reference"

    print("KERNEL_OK")
</pallas_src>

<mosaic_0001>
module attributes {stable_mosaic.version = 11 : i64} {
  func.func @qnet_kernel(%arg0: i32, %arg1: memref<16x128xf32, #tpu.memory_space<vmem>>, %arg2: memref<128x128xf32, #tpu.memory_space<vmem>>, %arg3: memref<1x128xf32, #tpu.memory_space<vmem>>, %arg4: memref<128x128xf32, #tpu.memory_space<vmem>>, %arg5: memref<1x128xf32, #tpu.memory_space<vmem>>, %arg6: memref<128x128xf32, #tpu.memory_space<vmem>>, %arg7: memref<1x128xf32, #tpu.memory_space<vmem>>, %arg8: memref<16x128xf32, #tpu.memory_space<vmem>>) attributes {dimension_semantics = [#tpu.dimension_semantics<parallel>], iteration_bounds = array<i64: 1>, scalar_prefetch = 0 : i64, scratch_operands = 0 : i64, tpu.core_type = #tpu.core_type<tc>, window_params = [{transform_indices = @transform_0, window_bounds = array<i64: 16, 128>}, {pipeline_mode = #tpu.pipeline_mode<synchronous>, transform_indices = @transform_1, window_bounds = array<i64: 128, 128>}, {pipeline_mode = #tpu.pipeline_mode<synchronous>, transform_indices = @transform_2, window_bounds = array<i64: 1, 128>}, {pipeline_mode = #tpu.pipeline_mode<synchronous>, transform_indices = @transform_3, window_bounds = array<i64: 128, 128>}, {pipeline_mode = #tpu.pipeline_mode<synchronous>, transform_indices = @transform_4, window_bounds = array<i64: 1, 128>}, {pipeline_mode = #tpu.pipeline_mode<synchronous>, transform_indices = @transform_5, window_bounds = array<i64: 128, 128>}, {pipeline_mode = #tpu.pipeline_mode<synchronous>, transform_indices = @transform_6, window_bounds = array<i64: 1, 128>}, {transform_indices = @transform_7, window_bounds = array<i64: 16, 128>}]} {
    %c0 = arith.constant 0 : index
    %c0_0 = arith.constant 0 : index
    %0 = vector.load %arg1[%c0, %c0_0] : memref<16x128xf32, #tpu.memory_space<vmem>>, vector<16x128xf32>
    %c0_1 = arith.constant 0 : index
    %c0_2 = arith.constant 0 : index
    %1 = vector.load %arg2[%c0_1, %c0_2] : memref<128x128xf32, #tpu.memory_space<vmem>>, vector<128x128xf32>
    %cst = arith.constant dense<0.000000e+00> : vector<16x128xf32>
    %2 = tpu.matmul %0, %1, %cst {dimension_numbers = #tpu.dot_dimension_numbers<[1], [0], [0], [1], [0, 0, 1, 1], [], []>} : vector<16x128xf32>, vector<128x128xf32>, vector<16x128xf32> -> vector<16x128xf32>
    %c0_3 = arith.constant 0 : index
    %c0_4 = arith.constant 0 : index
    %3 = vector.load %arg3[%c0_3, %c0_4] : memref<1x128xf32, #tpu.memory_space<vmem>>, vector<1x128xf32>
    %4 = vector.broadcast %3 : vector<1x128xf32> to vector<16x128xf32>
    %5 = arith.addf %2, %4 : vector<16x128xf32>
    %cst_5 = arith.constant 0.000000e+00 : f32
    %6 = vector.broadcast %cst_5 : f32 to vector<16x128xf32>
    %7 = arith.maximumf %5, %6 : vector<16x128xf32>
    %c0_6 = arith.constant 0 : index
    %c0_7 = arith.constant 0 : index
    %8 = vector.load %arg4[%c0_6, %c0_7] : memref<128x128xf32, #tpu.memory_space<vmem>>, vector<128x128xf32>
    %cst_8 = arith.constant dense<0.000000e+00> : vector<16x128xf32>
    %9 = tpu.matmul %7, %8, %cst_8 {dimension_numbers = #tpu.dot_dimension_numbers<[1], [0], [0], [1], [0, 0, 1, 1], [], []>} : vector<16x128xf32>, vector<128x128xf32>, vector<16x128xf32> -> vector<16x128xf32>
    %c0_9 = arith.constant 0 : index
    %c0_10 = arith.constant 0 : index
    %10 = vector.load %arg5[%c0_9, %c0_10] : memref<1x128xf32, #tpu.memory_space<vmem>>, vector<1x128xf32>
    %11 = vector.broadcast %10 : vector<1x128xf32> to vector<16x128xf32>
    %12 = arith.addf %9, %11 : vector<16x128xf32>
    %cst_11 = arith.constant 0.000000e+00 : f32
    %13 = vector.broadcast %cst_11 : f32 to vector<16x128xf32>
    %14 = arith.maximumf %12, %13 : vector<16x128xf32>
    %c0_12 = arith.constant 0 : index
    %c0_13 = arith.constant 0 : index
    %15 = vector.load %arg6[%c0_12, %c0_13] : memref<128x128xf32, #tpu.memory_space<vmem>>, vector<128x128xf32>
    %cst_14 = arith.constant dense<0.000000e+00> : vector<16x128xf32>
    %16 = tpu.matmul %14, %15, %cst_14 {dimension_numbers = #tpu.dot_dimension_numbers<[1], [0], [0], [1], [0, 0, 1, 1], [], []>} : vector<16x128xf32>, vector<128x128xf32>, vector<16x128xf32> -> vector<16x128xf32>
    %c0_15 = arith.constant 0 : index
    %c0_16 = arith.constant 0 : index
    %17 = vector.load %arg7[%c0_15, %c0_16] : memref<1x128xf32, #tpu.memory_space<vmem>>, vector<1x128xf32>
    %18 = vector.broadcast %17 : vector<1x128xf32> to vector<16x128xf32>
    %19 = arith.addf %16, %18 : vector<16x128xf32>
    %c0_17 = arith.constant 0 : index
    %c0_18 = arith.constant 0 : index
    %20 = vector.load %arg8[%c0_17, %c0_18] : memref<16x128xf32, #tpu.memory_space<vmem>>, vector<16x128xf32>
    tpu.vector_store %arg8[%c0_17, %c0_18], %19 {strides = array<i32>} : memref<16x128xf32, #tpu.memory_space<vmem>>, vector<16x128xf32>,
    return
  }
  func.func @transform_0(%arg0: i32) -> (i32, i32) {
    %c0_i32 = arith.constant 0 : i32
    %c0_i32_0 = arith.constant 0 : i32
    return %arg0, %c0_i32 : i32, i32
  }
  func.func @transform_1(%arg0: i32) -> (i32, i32) {
    %c0_i32 = arith.constant 0 : i32
    %c0_i32_0 = arith.constant 0 : i32
    %c0_i32_1 = arith.constant 0 : i32
    return %c0_i32, %c0_i32_0 : i32, i32
  }
  func.func @transform_2(%arg0: i32) -> (i32, i32) {
    %c0_i32 = arith.constant 0 : i32
    %c0_i32_0 = arith.constant 0 : i32
    %c0_i32_1 = arith.constant 0 : i32
    return %c0_i32, %c0_i32_0 : i32, i32
  }
  func.func @transform_3(%arg0: i32) -> (i32, i32) {
    %c0_i32 = arith.constant 0 : i32
    %c0_i32_0 = arith.constant 0 : i32
    %c0_i32_1 = arith.constant 0 : i32
    return %c0_i32, %c0_i32_0 : i32, i32
  }
  func.func @transform_4(%arg0: i32) -> (i32, i32) {
    %c0_i32 = arith.constant 0 : i32
    %c0_i32_0 = arith.constant 0 : i32
    %c0_i32_1 = arith.constant 0 : i32
    return %c0_i32, %c0_i32_0 : i32, i32
  }
  func.func @transform_5(%arg0: i32) -> (i32, i32) {
    %c0_i32 = arith.constant 0 : i32
    %c0_i32_0 = arith.constant 0 : i32
    %c0_i32_1 = arith.constant 0 : i32
    return %c0_i32, %c0_i32_0 : i32, i32
  }
  func.func @transform_6(%arg0: i32) -> (i32, i32) {
    %c0_i32 = arith.constant 0 : i32
    %c0_i32_0 = arith.constant 0 : i32
    %c0_i32_1 = arith.constant 0 : i32
    return %c0_i32, %c0_i32_0 : i32, i32
  }
  func.func @transform_7(%arg0: i32) -> (i32, i32) {
    %c0_i32 = arith.constant 0 : i32
    %c0_i32_0 = arith.constant 0 : i32
    return %arg0, %c0_i32 : i32, i32
  }
}

</mosaic_0001>

<llo_original>
// kernel: qnetwork_forward.1
$region0: #{qnetwork_forward.1}
  #allocation0 [shape = 'u32[]', space=smem, size = 0x4, offset = 0x4, fixed_abs, tag = 'smem constant byte address 0x4 - core index']
  #allocation1 [shape = 'u32[144,128]{1,0:T(1,128)}', space=vmem, size = 0x12000, scoped, tag = 'internal scratch']
  %s0 = inlined_call_operand.vmem [shape: f32[16,128], index: 0, kind: input, shape index: {}]
  %s1 = inlined_call_operand.vmem [shape: f32[128,128], index: 1, kind: input, shape index: {}]
  %s2 = inlined_call_operand.vmem [shape: f32[1,128], index: 2, kind: input, shape index: {}]
  %s3 = inlined_call_operand.vmem [shape: f32[128,128], index: 3, kind: input, shape index: {}]
  %s4 = inlined_call_operand.vmem [shape: f32[1,128], index: 4, kind: input, shape index: {}]
  %s5 = inlined_call_operand.vmem [shape: f32[128,128], index: 5, kind: input, shape index: {}]
  %s6 = inlined_call_operand.vmem [shape: f32[1,128], index: 6, kind: input, shape index: {}]
  %s7 = inlined_call_operand.vmem [shape: f32[16,128], index: 7, kind: output, shape index: {}]
  %s8 = sld [smem:[#allocation0]]
  $region38: #{qnetwork_forward.1} parent=0
    _
  %s10 = ssub.s32 1, %s8
  %s11 = scalar_select 0, %s10, %s8
  // Predicated region
  $region2: #{qnetwork_forward.1} parent=0 // pred_check
    _
  $region3: #{qnetwork_forward.1} parent=0 // pred_check_branch
    %13 = sbr.rel (0) target = $region5
  $region4: #{qnetwork_forward.1} parent=0 // pred_region
    _
  $region5: #{qnetwork_forward.1} parent=0 // pred_fallthru
    _
  // Predicated region
  $region6: #{qnetwork_forward.1} parent=0 // pred_check
    _
  $region7: #{qnetwork_forward.1} parent=0 // pred_check_branch
    %15 = sbr.rel (0) target = $region9
  $region8: #{qnetwork_forward.1} parent=0 // pred_region
    _
  $region9: #{qnetwork_forward.1} parent=0 // pred_fallthru
    _
  // Predicated region
  $region10: #{qnetwork_forward.1} parent=0 // pred_check
    _
  $region11: #{qnetwork_forward.1} parent=0 // pred_check_branch
    %17 = sbr.rel (0) target = $region13
  $region12: #{qnetwork_forward.1} parent=0 // pred_region
    _
  $region13: #{qnetwork_forward.1} parent=0 // pred_fallthru
    _
  // Predicated region
  $region14: #{qnetwork_forward.1} parent=0 // pred_check
    _
  $region15: #{qnetwork_forward.1} parent=0 // pred_check_branch
    %19 = sbr.rel (0) target = $region17
  $region16: #{qnetwork_forward.1} parent=0 // pred_region
    _
  $region17: #{qnetwork_forward.1} parent=0 // pred_fallthru
    _
  // Predicated region
  $region18: #{qnetwork_forward.1} parent=0 // pred_check
    _
  $region19: #{qnetwork_forward.1} parent=0 // pred_check_branch
    %21 = sbr.rel (0) target = $region21
  $region20: #{qnetwork_forward.1} parent=0 // pred_region
    _
  $region21: #{qnetwork_forward.1} parent=0 // pred_fallthru
    _
  // Predicated region
  $region22: #{qnetwork_forward.1} parent=0 // pred_check
    _
  $region23: #{qnetwork_forward.1} parent=0 // pred_check_branch
    %23 = sbr.rel (0) target = $region25
  $region24: #{qnetwork_forward.1} parent=0 // pred_region
    _
  $region25: #{qnetwork_forward.1} parent=0 // pred_fallthru
    _
  // Predicated region
  $region26: #{qnetwork_forward.1} parent=0 // pred_check
    _
  $region27: #{qnetwork_forward.1} parent=0 // pred_check_branch
    %25 = sbr.rel (0) target = $region29
  $region28: #{qnetwork_forward.1} parent=0 // pred_region
    _
  $region29: #{qnetwork_forward.1} parent=0 // pred_fallthru
    _
  %v26 = vld [vmem:[%s0] sm:$0xff]
  %v27 = vld [vmem:[%s0 + $0x8] sm:$0xff]
  %v28 = vld [vmem:[%s1] sm:$0xff]
  %v29 = vld [vmem:[%s1 + $0x8] sm:$0xff]
  %v30 = vld [vmem:[%s1 + $0x10] sm:$0xff]
  %v31 = vld [vmem:[%s1 + $0x18] sm:$0xff]
  %v32 = vld [vmem:[%s1 + $0x20] sm:$0xff]
  %v33 = vld [vmem:[%s1 + $0x28] sm:$0xff]
  %v34 = vld [vmem:[%s1 + $0x30] sm:$0xff]
  %v35 = vld [vmem:[%s1 + $0x38] sm:$0xff]
  %v36 = vld [vmem:[%s1 + $0x40] sm:$0xff]
  %v37 = vld [vmem:[%s1 + $0x48] sm:$0xff]
  %v38 = vld [vmem:[%s1 + $0x50] sm:$0xff]
  %v39 = vld [vmem:[%s1 + $0x58] sm:$0xff]
  %v40 = vld [vmem:[%s1 + $0x60] sm:$0xff]
  %v41 = vld [vmem:[%s1 + $0x68] sm:$0xff]
  %v42 = vld [vmem:[%s1 + $0x70] sm:$0xff]
  %v43 = vld [vmem:[%s1 + $0x78] sm:$0xff]
  %v44 = vld [vmem:[%s2] sm:$0x1]
  %v46 = vlaneseq
  %v47 = vshrl.u32 %v46, 7
  %v48 = vsub.s32 0, %v47
  %v49 = vrot.slane %v44, %v48
  %51 = vmatprep.subr.mxu0 0.0
  %52 = vmatpush1.msra.mxu0 %v28
  %53 = vmatprep.subr.mxu0 0.0
  %54 = vmatpush1.msra.mxu0 %v29
  %55 = vmatprep.subr.mxu0 0.0
  %56 = vmatpush1.msra.mxu0 %v30
  %57 = vmatprep.subr.mxu0 0.0
  %58 = vmatpush1.msra.mxu0 %v31
  %59 = vmatprep.subr.mxu0 0.0
  %60 = vmatpush1.msra.mxu0 %v32
  %61 = vmatprep.subr.mxu0 0.0
  %62 = vmatpush1.msra.mxu0 %v33
  %63 = vmatprep.subr.mxu0 0.0
  %64 = vmatpush1.msra.mxu0 %v34
  %65 = vmatprep.subr.mxu0 0.0
  %66 = vmatpush1.msra.mxu0 %v35
  %67 = vmatprep.subr.mxu0 0.0
  %68 = vmatpush1.msra.mxu0 %v36
  %69 = vmatprep.subr.mxu0 0.0
  %70 = vmatpush1.msra.mxu0 %v37
  %71 = vmatprep.subr.mxu0 0.0
  %72 = vmatpush1.msra.mxu0 %v38
  %73 = vmatprep.subr.mxu0 0.0
  %74 = vmatpush1.msra.mxu0 %v39
  %75 = vmatprep.subr.mxu0 0.0
  %76 = vmatpush1.msra.mxu0 %v40
  %77 = vmatprep.subr.mxu0 0.0
  %78 = vmatpush1.msra.mxu0 %v41
  %79 = vmatprep.subr.mxu0 0.0
  %80 = vmatpush1.msra.mxu0 %v42
  %81 = vmatprep.subr.mxu0 0.0
  %82 = vmatpush1.msra.mxu0 %v43
  %83 = vmatprep.subr.mxu0 0.0
  %84 = vmatpush1.msra.mxu0 0.0
  %85 = vmatprep.subr.mxu0 0.0
  %86 = vmatpush1.msra.mxu0 0.0
  %87 = vmatprep.subr.mxu0 0.0
  %88 = vmatpush1.msra.mxu0 0.0
  %89 = vmatprep.subr.mxu0 0.0
  %90 = vmatpush1.msra.mxu0 0.0
  %91 = vmatprep.subr.mxu0 0.0
  %92 = vmatpush1.msra.mxu0 0.0
  %93 = vmatprep.subr.mxu0 0.0
  %94 = vmatpush1.msra.mxu0 0.0
  %95 = vmatprep.subr.mxu0 0.0
  %96 = vmatpush1.msra.mxu0 0.0
  %97 = vmatprep.subr.mxu0 0.0
  %98 = vmatpush1.msra.mxu0 0.0
  %99 = vmatprep.subr.mxu0 0.0
  %100 = vmatpush1.msra.mxu0 0.0
  %101 = vmatprep.subr.mxu0 0.0
  %102 = vmatpush1.msra.mxu0 0.0
  %103 = vmatprep.subr.mxu0 0.0
  %104 = vmatpush1.msra.mxu0 0.0
  %105 = vmatprep.subr.mxu0 0.0
  %106 = vmatpush1.msra.mxu0 0.0
  %107 = vmatprep.subr.mxu0 0.0
  %108 = vmatpush1.msra.mxu0 0.0
  %109 = vmatprep.subr.mxu0 0.0
  %110 = vmatpush1.msra.mxu0 0.0
  %111 = vmatprep.subr.mxu0 0.0
  %112 = vmatpush1.msra.mxu0 0.0
  %113 = vmatprep.subr.mxu0 0.0
  %114 = vmatpush1.msra.mxu0 0.0
  %115 = vmatprep.mubr.f32.mxu0 0.0
  %116 = vmatmul.mubr.f32.gmra.mrb[0].mxu0 %v26
  %v117 = vpop.f32.mrb[0].mxu0
  %v118 = vadd.f32 %v49, %v117
  %v119 = vpop.f32.mrb[0].mxu0
  %120 = vmatprep.mubr.f32.mxu0 0.0
  %121 = vmatmul.mubr.f32.gmra.mrb[0].mxu0 %v27
  %v122 = vpop.f32.mrb[0].mxu0
  %v123 = vadd.f32 %v49, %v122
  %v124 = vpop.f32.mrb[0].mxu0
  %125 = vdwg.mxu0
  %v126 = vmax.f32 %v118, 0.0
  %v127 = vmax.f32 %v123, 0.0
  %v128 = vld [vmem:[%s3] sm:$0xff]
  %v129 = vld [vmem:[%s3 + $0x8] sm:$0xff]
  %v130 = vld [vmem:[%s3 + $0x10] sm:$0xff]
  %v131 = vld [vmem:[%s3 + $0x18] sm:$0xff]
  %v132 = vld [vmem:[%s3 + $0x20] sm:$0xff]
  %v133 = vld [vmem:[%s3 + $0x28] sm:$0xff]
  %v134 = vld [vmem:[%s3 + $0x30] sm:$0xff]
  %v135 = vld [vmem:[%s3 + $0x38] sm:$0xff]
  %v136 = vld [vmem:[%s3 + $0x40] sm:$0xff]
  %v137 = vld [vmem:[%s3 + $0x48] sm:$0xff]
  %v138 = vld [vmem:[%s3 + $0x50] sm:$0xff]
  %v139 = vld [vmem:[%s3 + $0x58] sm:$0xff]
  %v140 = vld [vmem:[%s3 + $0x60] sm:$0xff]
  %v141 = vld [vmem:[%s3 + $0x68] sm:$0xff]
  %v142 = vld [vmem:[%s3 + $0x70] sm:$0xff]
  %v143 = vld [vmem:[%s3 + $0x78] sm:$0xff]
  %v144 = vld [vmem:[%s4] sm:$0x1]
  %v146 = vlaneseq
  %v147 = vshrl.u32 %v146, 7
  %v148 = vsub.s32 0, %v147
  %v149 = vrot.slane %v144, %v148
  %151 = vmatprep.subr.mxu0 0.0
  %152 = vmatpush1.msra.mxu0 %v128
  %153 = vmatprep.subr.mxu0 0.0
  %154 = vmatpush1.msra.mxu0 %v129
  %155 = vmatprep.subr.mxu0 0.0
  %156 = vmatpush1.msra.mxu0 %v130
  %157 = vmatprep.subr.mxu0 0.0
  %158 = vmatpush1.msra.mxu0 %v131
  %159 = vmatprep.subr.mxu0 0.0
  %160 = vmatpush1.msra.mxu0 %v132
  %161 = vmatprep.subr.mxu0 0.0
  %162 = vmatpush1.msra.mxu0 %v133
  %163 = vmatprep.subr.mxu0 0.0
  %164 = vmatpush1.msra.mxu0 %v134
  %165 = vmatprep.subr.mxu0 0.0
  %166 = vmatpush1.msra.mxu0 %v135
  %167 = vmatprep.subr.mxu0 0.0
  %168 = vmatpush1.msra.mxu0 %v136
  %169 = vmatprep.subr.mxu0 0.0
  %170 = vmatpush1.msra.mxu0 %v137
  %171 = vmatprep.subr.mxu0 0.0
  %172 = vmatpush1.msra.mxu0 %v138
  %173 = vmatprep.subr.mxu0 0.0
  %174 = vmatpush1.msra.mxu0 %v139
  %175 = vmatprep.subr.mxu0 0.0
  %176 = vmatpush1.msra.mxu0 %v140
  %177 = vmatprep.subr.mxu0 0.0
  %178 = vmatpush1.msra.mxu0 %v141
  %179 = vmatprep.subr.mxu0 0.0
  %180 = vmatpush1.msra.mxu0 %v142
  %181 = vmatprep.subr.mxu0 0.0
  %182 = vmatpush1.msra.mxu0 %v143
  %183 = vmatprep.subr.mxu0 0.0
  %184 = vmatpush1.msra.mxu0 0.0
  %185 = vmatprep.subr.mxu0 0.0
  %186 = vmatpush1.msra.mxu0 0.0
  %187 = vmatprep.subr.mxu0 0.0
  %188 = vmatpush1.msra.mxu0 0.0
  %189 = vmatprep.subr.mxu0 0.0
  %190 = vmatpush1.msra.mxu0 0.0
  %191 = vmatprep.subr.mxu0 0.0
  %192 = vmatpush1.msra.mxu0 0.0
  %193 = vmatprep.subr.mxu0 0.0
  %194 = vmatpush1.msra.mxu0 0.0
  %195 = vmatprep.subr.mxu0 0.0
  %196 = vmatpush1.msra.mxu0 0.0
  %197 = vmatprep.subr.mxu0 0.0
  %198 = vmatpush1.msra.mxu0 0.0
  %199 = vmatprep.subr.mxu0 0.0
  %200 = vmatpush1.msra.mxu0 0.0
  %201 = vmatprep.subr.mxu0 0.0
  %202 = vmatpush1.msra.mxu0 0.0
  %203 = vmatprep.subr.mxu0 0.0
  %204 = vmatpush1.msra.mxu0 0.0
  %205 = vmatprep.subr.mxu0 0.0
  %206 = vmatpush1.msra.mxu0 0.0
  %207 = vmatprep.subr.mxu0 0.0
  %208 = vmatpush1.msra.mxu0 0.0
  %209 = vmatprep.subr.mxu0 0.0
  %210 = vmatpush1.msra.mxu0 0.0
  %211 = vmatprep.subr.mxu0 0.0
  %212 = vmatpush1.msra.mxu0 0.0
  %213 = vmatprep.subr.mxu0 0.0
  %214 = vmatpush1.msra.mxu0 0.0
  %215 = vmatprep.mubr.f32.mxu0 0.0
  %216 = vmatmul.mubr.f32.gmra.mrb[0].mxu0 %v126
  %v217 = vpop.f32.mrb[0].mxu0
  %v218 = vadd.f32 %v149, %v217
  %v219 = vpop.f32.mrb[0].mxu0
  %220 = vmatprep.mubr.f32.mxu0 0.0
  %221 = vmatmul.mubr.f32.gmra.mrb[0].mxu0 %v127
  %v222 = vpop.f32.mrb[0].mxu0
  %v223 = vadd.f32 %v149, %v222
  %v224 = vpop.f32.mrb[0].mxu0
  %225 = vdwg.mxu0
  %v226 = vmax.f32 %v218, 0.0
  %v227 = vmax.f32 %v223, 0.0
  %v228 = vld [vmem:[%s5] sm:$0xff]
  %v229 = vld [vmem:[%s5 + $0x8] sm:$0xff]
  %v230 = vld [vmem:[%s5 + $0x10] sm:$0xff]
  %v231 = vld [vmem:[%s5 + $0x18] sm:$0xff]
  %v232 = vld [vmem:[%s5 + $0x20] sm:$0xff]
  %v233 = vld [vmem:[%s5 + $0x28] sm:$0xff]
  %v234 = vld [vmem:[%s5 + $0x30] sm:$0xff]
  %v235 = vld [vmem:[%s5 + $0x38] sm:$0xff]
  %v236 = vld [vmem:[%s5 + $0x40] sm:$0xff]
  %v237 = vld [vmem:[%s5 + $0x48] sm:$0xff]
  %v238 = vld [vmem:[%s5 + $0x50] sm:$0xff]
  %v239 = vld [vmem:[%s5 + $0x58] sm:$0xff]
  %v240 = vld [vmem:[%s5 + $0x60] sm:$0xff]
  %v241 = vld [vmem:[%s5 + $0x68] sm:$0xff]
  %v242 = vld [vmem:[%s5 + $0x70] sm:$0xff]
  %v243 = vld [vmem:[%s5 + $0x78] sm:$0xff]
  %v244 = vld [vmem:[%s6] sm:$0x1]
  %v246 = vlaneseq
  %v247 = vshrl.u32 %v246, 7
  %v248 = vsub.s32 0, %v247
  %v249 = vrot.slane %v244, %v248
  %251 = vmatprep.subr.mxu0 0.0
  %252 = vmatpush1.msra.mxu0 %v228
  %253 = vmatprep.subr.mxu0 0.0
  %254 = vmatpush1.msra.mxu0 %v229
  %255 = vmatprep.subr.mxu0 0.0
  %256 = vmatpush1.msra.mxu0 %v230
  %257 = vmatprep.subr.mxu0 0.0
  %258 = vmatpush1.msra.mxu0 %v231
  %259 = vmatprep.subr.mxu0 0.0
  %260 = vmatpush1.msra.mxu0 %v232
  %261 = vmatprep.subr.mxu0 0.0
  %262 = vmatpush1.msra.mxu0 %v233
  %263 = vmatprep.subr.mxu0 0.0
  %264 = vmatpush1.msra.mxu0 %v234
  %265 = vmatprep.subr.mxu0 0.0
  %266 = vmatpush1.msra.mxu0 %v235
  %267 = vmatprep.subr.mxu0 0.0
  %268 = vmatpush1.msra.mxu0 %v236
  %269 = vmatprep.subr.mxu0 0.0
  %270 = vmatpush1.msra.mxu0 %v237
  %271 = vmatprep.subr.mxu0 0.0
  %272 = vmatpush1.msra.mxu0 %v238
  %273 = vmatprep.subr.mxu0 0.0
  %274 = vmatpush1.msra.mxu0 %v239
  %275 = vmatprep.subr.mxu0 0.0
  %276 = vmatpush1.msra.mxu0 %v240
  %277 = vmatprep.subr.mxu0 0.0
  %278 = vmatpush1.msra.mxu0 %v241
  %279 = vmatprep.subr.mxu0 0.0
  %280 = vmatpush1.msra.mxu0 %v242
  %281 = vmatprep.subr.mxu0 0.0
  %282 = vmatpush1.msra.mxu0 %v243
  %283 = vmatprep.subr.mxu0 0.0
  %284 = vmatpush1.msra.mxu0 0.0
  %285 = vmatprep.subr.mxu0 0.0
  %286 = vmatpush1.msra.mxu0 0.0
  %287 = vmatprep.subr.mxu0 0.0
  %288 = vmatpush1.msra.mxu0 0.0
  %289 = vmatprep.subr.mxu0 0.0
  %290 = vmatpush1.msra.mxu0 0.0
  %291 = vmatprep.subr.mxu0 0.0
  %292 = vmatpush1.msra.mxu0 0.0
  %293 = vmatprep.subr.mxu0 0.0
  %294 = vmatpush1.msra.mxu0 0.0
  %295 = vmatprep.subr.mxu0 0.0
  %296 = vmatpush1.msra.mxu0 0.0
  %297 = vmatprep.subr.mxu0 0.0
  %298 = vmatpush1.msra.mxu0 0.0
  %299 = vmatprep.subr.mxu0 0.0
  %300 = vmatpush1.msra.mxu0 0.0
  %301 = vmatprep.subr.mxu0 0.0
  %302 = vmatpush1.msra.mxu0 0.0
  %303 = vmatprep.subr.mxu0 0.0
  %304 = vmatpush1.msra.mxu0 0.0
  %305 = vmatprep.subr.mxu0 0.0
  %306 = vmatpush1.msra.mxu0 0.0
  %307 = vmatprep.subr.mxu0 0.0
  %308 = vmatpush1.msra.mxu0 0.0
  %309 = vmatprep.subr.mxu0 0.0
  %310 = vmatpush1.msra.mxu0 0.0
  %311 = vmatprep.subr.mxu0 0.0
  %312 = vmatpush1.msra.mxu0 0.0
  %313 = vmatprep.subr.mxu0 0.0
  %314 = vmatpush1.msra.mxu0 0.0
  %315 = vmatprep.mubr.f32.mxu0 0.0
  %316 = vmatmul.mubr.f32.gmra.mrb[0].mxu0 %v226
  %v317 = vpop.f32.mrb[0].mxu0
  %v318 = vadd.f32 %v249, %v317
  %v319 = vpop.f32.mrb[0].mxu0
  %320 = vmatprep.mubr.f32.mxu0 0.0
  %321 = vmatmul.mubr.f32.gmra.mrb[0].mxu0 %v227
  %v322 = vpop.f32.mrb[0].mxu0
  %v323 = vadd.f32 %v249, %v322
  %v324 = vpop.f32.mrb[0].mxu0
  %325 = vdwg.mxu0
  %326 = vst [vmem:[%s7] sm:$0xff] %v318
  %327 = vst [vmem:[%s7 + $0x8] sm:$0xff] %v323
  // Predicated region
  $region30: #{qnetwork_forward.1} parent=0 // pred_check
    _
  $region31: #{qnetwork_forward.1} parent=0 // pred_check_branch
    %329 = sbr.rel (0) target = $region33
  $region32: #{qnetwork_forward.1} parent=0 // pred_region
    _
  $region33: #{qnetwork_forward.1} parent=0 // pred_fallthru
    _
  // Predicated region
  $region34: #{qnetwork_forward.1} parent=0 // pred_check
    _
  $region35: #{qnetwork_forward.1} parent=0 // pred_check_branch
    %331 = sbr.rel (0) target = $region37
  $region36: #{qnetwork_forward.1} parent=0 // pred_region
    _
  $region37: #{qnetwork_forward.1} parent=0 // pred_fallthru
    _

</llo_original>
